<compile_context>
chip_gen: v7x
topology: tpu7x:2x2x1
jax: 0.10.0
libtpu: 0.0.40
codegen_flags: <defaults>
</compile_context>

<pallas_src>
import math

import jax
import jax.numpy as jnp
from jax.experimental import pallas as pl
from jax.experimental.pallas import tpu as pltpu

EMBED_DIM = 10
IN_FEATURES = 128
HIDDEN = 256


def _round_up(n, m):
    return ((n + m - 1) // m) * m


def _make_kernel(z_on_vpu):
    def kernel(x_ref, z_ref, w1x_ref, w1z_ref, b1_ref, w2_ref, b2_ref, o_ref):
        cdt = w1x_ref.dtype  # MXU compute dtype (f32 or bf16); cast happens in-kernel
        # h = ReLU( cat([x, z]) @ W1 + b1 ) = ReLU( x @ W1x + z @ W1z + b1 )
        h = jnp.dot(x_ref[...].astype(cdt), w1x_ref[...],
                    preferred_element_type=jnp.float32)
        if z_on_vpu:
            # K=10 contribution as 10 broadcast rank-1 multiply-adds (VPU, f32),
            # skipping the padded 10->256 MXU tile pass.  Static Python loop so
            # the LLO scheduler sees straight-line code.
            zf = z_ref[...].astype(jnp.float32)         # (tb, 10)
            w1z = w1z_ref[...].astype(jnp.float32)      # (10, 256)
            for k in range(EMBED_DIM):
                h = h + zf[:, k:k + 1] * w1z[k:k + 1, :]
        else:
            h = h + jnp.dot(z_ref[...].astype(cdt), w1z_ref[...],
                            preferred_element_type=jnp.float32)
        h = h + b1_ref[...]                   # (1, 256) broadcast, f32
        h = jnp.maximum(h, 0.0)               # ReLU on VPU, f32
        out = jnp.dot(h.astype(cdt), w2_ref[...],
                      preferred_element_type=jnp.float32)
        out = out + b2_ref[...]               # (1, 10) broadcast, f32
        o_ref[...] = out.astype(o_ref.dtype)
    return kernel


def prepare_params(w1, b1, w2, b2, compute_dtype=jnp.float32):
    """Split W1 / reshape biases / cast weights ONCE (outside the forward).

    On v5e prefer compute_dtype=jnp.bfloat16 (bf16-native 128^2 MXU, low HBM BW).
    """
    assert w1.shape == (IN_FEATURES + EMBED_DIM, HIDDEN)
    assert w2.shape == (HIDDEN, EMBED_DIM)
    w1x = w1[:IN_FEATURES, :].astype(compute_dtype)      # (128, 256)
    w1z = w1[IN_FEATURES:, :].astype(compute_dtype)      # (10, 256)
    b1_2d = b1.reshape(1, HIDDEN).astype(jnp.float32)    # biases stay f32
    w2c = w2.astype(compute_dtype)                       # (256, 10)
    b2_2d = b2.reshape(1, EMBED_DIM).astype(jnp.float32)
    return w1x, w1z, b1_2d, w2c, b2_2d


def denoising_mlp_forward(x_features, z_t, params, *, tile_b=2048, z_on_vpu=False):
    """x_features: (B, 128), z_t: (B, 10) -> (B, 10) f32."""
    w1x, w1z, b1_2d, w2c, b2_2d = params

    B = x_features.shape[0]
    assert x_features.shape == (B, IN_FEATURES)
    assert z_t.shape == (B, EMBED_DIM)
    assert tile_b % 8 == 0, "tile_b must be a multiple of 8 (sublane alignment)"

    # Batch tile: multiple of 8, capped at tile_b.  No padding: the grid uses
    # cdiv and Pallas clips the partial last block on writeback.
    tb = min(tile_b, _round_up(B, 8))
    # v7x megacore: keep >= 2 grid steps when B allows so the "parallel" batch
    # axis is sharded across both TensorCores (no-op on v5e/v6e single-TC).
    tb = min(tb, max(8, _round_up(pl.cdiv(B, 2), 8)))
    grid = (pl.cdiv(B, tb),)

    flops = 2 * B * ((IN_FEATURES + EMBED_DIM) * HIDDEN + HIDDEN * EMBED_DIM)
    act_bytes = B * (IN_FEATURES + 2 * EMBED_DIM) * x_features.dtype.itemsize \
        + B * EMBED_DIM * 4
    wt_bytes = (w1x.size + w1z.size + w2c.size) * w1x.dtype.itemsize \
        + (b1_2d.size + b2_2d.size) * 4

    out = pl.pallas_call(
        _make_kernel(z_on_vpu),
        out_shape=jax.ShapeDtypeStruct((B, EMBED_DIM), jnp.float32),
        grid=grid,
        in_specs=[
            # batch-tiled activations (double-buffered across grid steps)
            pl.BlockSpec((tb, IN_FEATURES), lambda i: (i, 0)),
            pl.BlockSpec((tb, EMBED_DIM), lambda i: (i, 0)),
            # weights / biases: same block every step -> fetched once, VMEM-resident
            pl.BlockSpec((IN_FEATURES, HIDDEN), lambda i: (0, 0)),
            pl.BlockSpec((EMBED_DIM, HIDDEN), lambda i: (0, 0)),
            pl.BlockSpec((1, HIDDEN), lambda i: (0, 0)),
            pl.BlockSpec((HIDDEN, EMBED_DIM), lambda i: (0, 0)),
            pl.BlockSpec((1, EMBED_DIM), lambda i: (0, 0)),
        ],
        out_specs=pl.BlockSpec((tb, EMBED_DIM), lambda i: (i, 0)),
        compiler_params=pltpu.CompilerParams(
            dimension_semantics=("parallel",),
        ),
        cost_estimate=pl.CostEstimate(
            flops=flops, transcendentals=0,
            bytes_accessed=act_bytes + wt_bytes),
    )(x_features, z_t, w1x, w1z, b1_2d, w2c, b2_2d)

    return out


def init_params(key):
    """Deterministic init matching nn.Linear default (U(-1/sqrt(fan_in), 1/sqrt(fan_in)))."""
    k1, k2, k3, k4 = jax.random.split(key, 4)
    fan1 = IN_FEATURES + EMBED_DIM
    bound1 = 1.0 / math.sqrt(fan1)
    w1 = jax.random.uniform(k1, (fan1, HIDDEN), jnp.float32, -bound1, bound1)
    b1 = jax.random.uniform(k2, (HIDDEN,), jnp.float32, -bound1, bound1)
    bound2 = 1.0 / math.sqrt(HIDDEN)
    w2 = jax.random.uniform(k3, (HIDDEN, EMBED_DIM), jnp.float32, -bound2, bound2)
    b2 = jax.random.uniform(k4, (EMBED_DIM,), jnp.float32, -bound2, bound2)
    return w1, b1, w2, b2


def reference_forward(x_features, z_t, w1, b1, w2, b2):
    h = jnp.concatenate([x_features, z_t], axis=1) @ w1 + b1
    h = jnp.maximum(h, 0.0)
    return h @ w2 + b2


if __name__ == "__main__":
    key = jax.random.PRNGKey(0)
    k_params, k_x, k_z = jax.random.split(key, 3)

    w1, b1, w2, b2 = init_params(k_params)

    # --- Case 1: small batch, f32 compute, single grid step -------------------
    B = 8
    x_features = jax.random.normal(k_x, (B, IN_FEATURES), jnp.float32)
    z_t = jax.random.normal(k_z, (B, EMBED_DIM), jnp.float32)

    params_f32 = prepare_params(w1, b1, w2, b2, compute_dtype=jnp.float32)
    out = jax.block_until_ready(denoising_mlp_forward(x_features, z_t, params_f32))
    ref = reference_forward(x_features, z_t, w1, b1, w2, b2)
    assert out.shape == (B, EMBED_DIM)
    assert jnp.allclose(out, ref, atol=1e-5, rtol=1e-5), "f32 mismatch vs reference"

    # --- Case 2: B not a multiple of the tile -> partial last block, no padding
    B2 = 20
    x2 = jax.random.normal(jax.random.fold_in(k_x, 1), (B2, IN_FEATURES), jnp.float32)
    z2 = jax.random.normal(jax.random.fold_in(k_z, 1), (B2, EMBED_DIM), jnp.float32)
    out2 = jax.block_until_ready(
        denoising_mlp_forward(x2, z2, params_f32, tile_b=16))
    ref2 = reference_forward(x2, z2, w1, b1, w2, b2)
    assert out2.shape == (B2, EMBED_DIM)
    assert jnp.allclose(out2, ref2, atol=1e-5, rtol=1e-5), "gridded f32 mismatch"

    # --- Case 3: bf16 MXU operands (cast in-kernel), f32 accumulation ----------
    params_bf16 = prepare_params(w1, b1, w2, b2, compute_dtype=jnp.bfloat16)
    out_bf16 = jax.block_until_ready(
        denoising_mlp_forward(x_features, z_t, params_bf16))
    assert out_bf16.shape == (B, EMBED_DIM)
    assert jnp.allclose(out_bf16, ref, atol=5e-2, rtol=5e-2), "bf16 mismatch"

    # --- Case 4: z contribution on the VPU (rank-1 updates) --------------------
    out_vpu = jax.block_until_ready(
        denoising_mlp_forward(x_features, z_t, params_f32, z_on_vpu=True))
    assert jnp.allclose(out_vpu, ref, atol=1e-5, rtol=1e-5), "VPU z-path mismatch"

    print("KERNEL_OK")
</pallas_src>

<mosaic_0001>
module attributes {stable_mosaic.version = 11 : i64} {
  func.func @kernel(%arg0: i32, %arg1: memref<8x128xf32, #tpu.memory_space<vmem>>, %arg2: memref<8x10xf32, #tpu.memory_space<vmem>>, %arg3: memref<128x256xf32, #tpu.memory_space<vmem>>, %arg4: memref<10x256xf32, #tpu.memory_space<vmem>>, %arg5: memref<1x256xf32, #tpu.memory_space<vmem>>, %arg6: memref<256x10xf32, #tpu.memory_space<vmem>>, %arg7: memref<1x10xf32, #tpu.memory_space<vmem>>, %arg8: memref<8x10xf32, #tpu.memory_space<vmem>>) attributes {dimension_semantics = [#tpu.dimension_semantics<parallel>], iteration_bounds = array<i64: 1>, scalar_prefetch = 0 : i64, scratch_operands = 0 : i64, tpu.core_type = #tpu.core_type<tc>, window_params = [{transform_indices = @transform_0, window_bounds = array<i64: 8, 128>}, {transform_indices = @transform_1, window_bounds = array<i64: 8, 10>}, {pipeline_mode = #tpu.pipeline_mode<synchronous>, transform_indices = @transform_2, window_bounds = array<i64: 128, 256>}, {pipeline_mode = #tpu.pipeline_mode<synchronous>, transform_indices = @transform_3, window_bounds = array<i64: 10, 256>}, {pipeline_mode = #tpu.pipeline_mode<synchronous>, transform_indices = @transform_4, window_bounds = array<i64: 1, 256>}, {pipeline_mode = #tpu.pipeline_mode<synchronous>, transform_indices = @transform_5, window_bounds = array<i64: 256, 10>}, {pipeline_mode = #tpu.pipeline_mode<synchronous>, transform_indices = @transform_6, window_bounds = array<i64: 1, 10>}, {transform_indices = @transform_7, window_bounds = array<i64: 8, 10>}]} {
    %c0 = arith.constant 0 : index
    %c0_0 = arith.constant 0 : index
    %0 = vector.load %arg1[%c0, %c0_0] : memref<8x128xf32, #tpu.memory_space<vmem>>, vector<8x128xf32>
    %c0_1 = arith.constant 0 : index
    %c0_2 = arith.constant 0 : index
    %1 = vector.load %arg3[%c0_1, %c0_2] : memref<128x256xf32, #tpu.memory_space<vmem>>, vector<128x256xf32>
    %cst = arith.constant dense<0.000000e+00> : vector<8x256xf32>
    %2 = tpu.matmul %0, %1, %cst {dimension_numbers = #tpu.dot_dimension_numbers<[1], [0], [0], [1], [0, 0, 1, 1], [], []>} : vector<8x128xf32>, vector<128x256xf32>, vector<8x256xf32> -> vector<8x256xf32>
    %c0_3 = arith.constant 0 : index
    %c0_4 = arith.constant 0 : index
    %3 = vector.load %arg2[%c0_3, %c0_4] : memref<8x10xf32, #tpu.memory_space<vmem>>, vector<8x10xf32>
    %c0_5 = arith.constant 0 : index
    %c0_6 = arith.constant 0 : index
    %4 = vector.load %arg4[%c0_5, %c0_6] : memref<10x256xf32, #tpu.memory_space<vmem>>, vector<10x256xf32>
    %cst_7 = arith.constant dense<0.000000e+00> : vector<8x256xf32>
    %5 = tpu.matmul %3, %4, %cst_7 {dimension_numbers = #tpu.dot_dimension_numbers<[1], [0], [0], [1], [0, 0, 1, 1], [], []>} : vector<8x10xf32>, vector<10x256xf32>, vector<8x256xf32> -> vector<8x256xf32>
    %6 = arith.addf %2, %5 : vector<8x256xf32>
    %c0_8 = arith.constant 0 : index
    %c0_9 = arith.constant 0 : index
    %7 = vector.load %arg5[%c0_8, %c0_9] : memref<1x256xf32, #tpu.memory_space<vmem>>, vector<1x256xf32>
    %8 = vector.broadcast %7 : vector<1x256xf32> to vector<8x256xf32>
    %9 = arith.addf %6, %8 : vector<8x256xf32>
    %cst_10 = arith.constant 0.000000e+00 : f32
    %10 = vector.broadcast %cst_10 : f32 to vector<8x256xf32>
    %11 = arith.maximumf %9, %10 : vector<8x256xf32>
    %c0_11 = arith.constant 0 : index
    %c0_12 = arith.constant 0 : index
    %12 = vector.load %arg6[%c0_11, %c0_12] : memref<256x10xf32, #tpu.memory_space<vmem>>, vector<256x10xf32>
    %cst_13 = arith.constant dense<0.000000e+00> : vector<8x10xf32>
    %13 = tpu.matmul %11, %12, %cst_13 {dimension_numbers = #tpu.dot_dimension_numbers<[1], [0], [0], [1], [0, 0, 1, 1], [], []>} : vector<8x256xf32>, vector<256x10xf32>, vector<8x10xf32> -> vector<8x10xf32>
    %c0_14 = arith.constant 0 : index
    %c0_15 = arith.constant 0 : index
    %14 = vector.load %arg7[%c0_14, %c0_15] : memref<1x10xf32, #tpu.memory_space<vmem>>, vector<1x10xf32>
    %15 = vector.broadcast %14 : vector<1x10xf32> to vector<8x10xf32>
    %16 = arith.addf %13, %15 : vector<8x10xf32>
    %c0_16 = arith.constant 0 : index
    %c0_17 = arith.constant 0 : index
    %17 = vector.load %arg8[%c0_16, %c0_17] : memref<8x10xf32, #tpu.memory_space<vmem>>, vector<8x10xf32>
    tpu.vector_store %arg8[%c0_16, %c0_17], %16 {strides = array<i32>} : memref<8x10xf32, #tpu.memory_space<vmem>>, vector<8x10xf32>,
    return
  }
  func.func @transform_0(%arg0: i32) -> (i32, i32) {
    %c0_i32 = arith.constant 0 : i32
    %c0_i32_0 = arith.constant 0 : i32
    return %arg0, %c0_i32 : i32, i32
  }
  func.func @transform_1(%arg0: i32) -> (i32, i32) {
    %c0_i32 = arith.constant 0 : i32
    %c0_i32_0 = arith.constant 0 : i32
    return %arg0, %c0_i32 : i32, i32
  }
  func.func @transform_2(%arg0: i32) -> (i32, i32) {
    %c0_i32 = arith.constant 0 : i32
    %c0_i32_0 = arith.constant 0 : i32
    %c0_i32_1 = arith.constant 0 : i32
    return %c0_i32, %c0_i32_0 : i32, i32
  }
  func.func @transform_3(%arg0: i32) -> (i32, i32) {
    %c0_i32 = arith.constant 0 : i32
    %c0_i32_0 = arith.constant 0 : i32
    %c0_i32_1 = arith.constant 0 : i32
    return %c0_i32, %c0_i32_0 : i32, i32
  }
  func.func @transform_4(%arg0: i32) -> (i32, i32) {
    %c0_i32 = arith.constant 0 : i32
    %c0_i32_0 = arith.constant 0 : i32
    %c0_i32_1 = arith.constant 0 : i32
    return %c0_i32, %c0_i32_0 : i32, i32
  }
  func.func @transform_5(%arg0: i32) -> (i32, i32) {
    %c0_i32 = arith.constant 0 : i32
    %c0_i32_0 = arith.constant 0 : i32
    %c0_i32_1 = arith.constant 0 : i32
    return %c0_i32, %c0_i32_0 : i32, i32
  }
  func.func @transform_6(%arg0: i32) -> (i32, i32) {
    %c0_i32 = arith.constant 0 : i32
    %c0_i32_0 = arith.constant 0 : i32
    %c0_i32_1 = arith.constant 0 : i32
    return %c0_i32, %c0_i32_0 : i32, i32
  }
  func.func @transform_7(%arg0: i32) -> (i32, i32) {
    %c0_i32 = arith.constant 0 : i32
    %c0_i32_0 = arith.constant 0 : i32
    return %arg0, %c0_i32 : i32, i32
  }
}

</mosaic_0001>

<llo_original>
// kernel: tpu_custom_call.1
$region0: #{tpu_custom_call.1}
  #allocation0 [shape = 'u32[]', space=smem, size = 0x4, offset = 0x4, fixed_abs, tag = 'smem constant byte address 0x4 - core index']
  #allocation1 [shape = 'u32[144,128]{1,0:T(1,128)}', space=vmem, size = 0x12000, scoped, tag = 'internal scratch']
  %s0 = inlined_call_operand.hbm [shape: f32[8,128], index: 0, kind: input, shape index: {}]
  %s1 = inlined_call_operand.hbm [shape: f32[8,10], index: 1, kind: input, shape index: {}]
  %s2 = inlined_call_operand.vmem [shape: f32[128,256], index: 2, kind: input, shape index: {}]
  %s3 = inlined_call_operand.vmem [shape: f32[10,256], index: 3, kind: input, shape index: {}]
  %s4 = inlined_call_operand.vmem [shape: f32[1,256], index: 4, kind: input, shape index: {}]
  %s5 = inlined_call_operand.vmem [shape: f32[256,10], index: 5, kind: input, shape index: {}]
  %s6 = inlined_call_operand.vmem [shape: f32[1,10], index: 6, kind: input, shape index: {}]
  %s7 = inlined_call_operand.hbm [shape: f32[8,10], index: 7, kind: output, shape index: {}]
  %s8 = sld [smem:[#allocation0]]
  $region46: #{tpu_custom_call.1} parent=0
    _
  %s10 = ssub.s32 1, %s8
  %s11 = scalar_select 0, %s10, %s8
  $region1: #{tpu_custom_call.1} parent=0
    #allocation2 [shape = 'u8[4096]{0}', space=vmem, size = 0x1000, scoped, tag = 'input window, operand 0, single buffered']
    #allocation3 [shape = 's32[1]{0}', space=sflag, size = 0x4, scoped, tag = 'scoped memory for tpu_custom_call.1']
    #allocation4 [shape = 's32[1]{0}', space=sflag, size = 0x4, scoped, tag = 'scoped memory for tpu_custom_call.1']
    #allocation5 [shape = 'u8[4096]{0}', space=vmem, size = 0x1000, scoped, tag = 'input window, operand 1, single buffered']
    #allocation6 [shape = 's32[1]{0}', space=sflag, size = 0x4, scoped, tag = 'scoped memory for tpu_custom_call.1']
    #allocation7 [shape = 'u8[4096]{0}', space=vmem, size = 0x1000, scoped, tag = 'output window, operand 0, single buffered']
    %12 = vsyncpa [#allocation3], 0
    %13 = vsyncpa [#allocation6], 0
    %14 = vsyncpa [#allocation4], 0
    // Predicated region
    $region2: #{tpu_custom_call.1} parent=1 // pred_check
      _
    $region3: #{tpu_custom_call.1} parent=1 // pred_check_branch
      %16 = sbr.rel (0) target = $region5
    $region4: #{tpu_custom_call.1} parent=1 // pred_region
      %s18 = ssub.s32 128, 128
      %19 = vsyncadd [#allocation3], %s18
      %s21 = sshll.u32 [#allocation2], 4
      %s22 = int_to_ptr.vmem [resolvable:$true] %s21
      %24 = dma.hbm_to_vmem [thread:$0]  %s0, 128, %s22, [#allocation3]
    $region5: #{tpu_custom_call.1} parent=1 // pred_fallthru
      _
    // Predicated region
    $region6: #{tpu_custom_call.1} parent=1 // pred_check
      _
    $region7: #{tpu_custom_call.1} parent=1 // pred_check_branch
      %26 = sbr.rel (0) target = $region9
    $region8: #{tpu_custom_call.1} parent=1 // pred_region
      %s28 = ssub.s32 128, 128
      %29 = vsyncadd [#allocation6], %s28
      %s31 = sshll.u32 [#allocation5], 4
      %s32 = int_to_ptr.vmem [resolvable:$true] %s31
      %34 = dma.hbm_to_vmem [thread:$0]  %s1, 128, %s32, [#allocation6]
    $region9: #{tpu_custom_call.1} parent=1 // pred_fallthru
      _
    // Predicated region
    $region10: #{tpu_custom_call.1} parent=1 // pred_check
      _
    $region11: #{tpu_custom_call.1} parent=1 // pred_check_branch
      %36 = sbr.rel (0) target = $region13
    $region12: #{tpu_custom_call.1} parent=1 // pred_region
      _
    $region13: #{tpu_custom_call.1} parent=1 // pred_fallthru
      _
    // Predicated region
    $region14: #{tpu_custom_call.1} parent=1 // pred_check
      _
    $region15: #{tpu_custom_call.1} parent=1 // pred_check_branch
      %38 = sbr.rel (0) target = $region17
    $region16: #{tpu_custom_call.1} parent=1 // pred_region
      _
    $region17: #{tpu_custom_call.1} parent=1 // pred_fallthru
      _
    // Predicated region
    $region18: #{tpu_custom_call.1} parent=1 // pred_check
      _
    $region19: #{tpu_custom_call.1} parent=1 // pred_check_branch
      %40 = sbr.rel (0) target = $region21
    $region20: #{tpu_custom_call.1} parent=1 // pred_region
      _
    $region21: #{tpu_custom_call.1} parent=1 // pred_fallthru
      _
    // Predicated region
    $region22: #{tpu_custom_call.1} parent=1 // pred_check
      _
    $region23: #{tpu_custom_call.1} parent=1 // pred_check_branch
      %42 = sbr.rel (0) target = $region25
    $region24: #{tpu_custom_call.1} parent=1 // pred_region
      _
    $region25: #{tpu_custom_call.1} parent=1 // pred_fallthru
      _
    // Predicated region
    $region26: #{tpu_custom_call.1} parent=1 // pred_check
      _
    $region27: #{tpu_custom_call.1} parent=1 // pred_check_branch
      %44 = sbr.rel (0) target = $region29
    $region28: #{tpu_custom_call.1} parent=1 // pred_region
      _
    $region29: #{tpu_custom_call.1} parent=1 // pred_fallthru
      _
    // Predicated region
    $region30: #{tpu_custom_call.1} parent=1 // pred_check
      _
    $region31: #{tpu_custom_call.1} parent=1 // pred_check_branch
      %46 = sbr.rel (0) target = $region33
    $region32: #{tpu_custom_call.1} parent=1 // pred_region
      %47 = dma.done [#allocation3], 128
    $region33: #{tpu_custom_call.1} parent=1 // pred_fallthru
      _
    // Predicated region
    $region34: #{tpu_custom_call.1} parent=1 // pred_check
      _
    $region35: #{tpu_custom_call.1} parent=1 // pred_check_branch
      %49 = sbr.rel (0) target = $region37
    $region36: #{tpu_custom_call.1} parent=1 // pred_region
      %50 = dma.done [#allocation6], 128
    $region37: #{tpu_custom_call.1} parent=1 // pred_fallthru
      _
    %v51 = vld [vmem:[#allocation2] sm:$0xff]
    %v52 = vld [vmem:[%s2] sm:$0xff]
    %v53 = vld [vmem:[%s2 + $0x8] sm:$0xff]
    %v54 = vld [vmem:[%s2 + $0x10] sm:$0xff]
    %v55 = vld [vmem:[%s2 + $0x18] sm:$0xff]
    %v56 = vld [vmem:[%s2 + $0x20] sm:$0xff]
    %v57 = vld [vmem:[%s2 + $0x28] sm:$0xff]
    %v58 = vld [vmem:[%s2 + $0x30] sm:$0xff]
    %v59 = vld [vmem:[%s2 + $0x38] sm:$0xff]
    %v60 = vld [vmem:[%s2 + $0x40] sm:$0xff]
    %v61 = vld [vmem:[%s2 + $0x48] sm:$0xff]
    %v62 = vld [vmem:[%s2 + $0x50] sm:$0xff]
    %v63 = vld [vmem:[%s2 + $0x58] sm:$0xff]
    %v64 = vld [vmem:[%s2 + $0x60] sm:$0xff]
    %v65 = vld [vmem:[%s2 + $0x68] sm:$0xff]
    %v66 = vld [vmem:[%s2 + $0x70] sm:$0xff]
    %v67 = vld [vmem:[%s2 + $0x78] sm:$0xff]
    %v68 = vld [vmem:[%s2 + $0x80] sm:$0xff]
    %v69 = vld [vmem:[%s2 + $0x88] sm:$0xff]
    %v70 = vld [vmem:[%s2 + $0x90] sm:$0xff]
    %v71 = vld [vmem:[%s2 + $0x98] sm:$0xff]
    %v72 = vld [vmem:[%s2 + $0xa0] sm:$0xff]
    %v73 = vld [vmem:[%s2 + $0xa8] sm:$0xff]
    %v74 = vld [vmem:[%s2 + $0xb0] sm:$0xff]
    %v75 = vld [vmem:[%s2 + $0xb8] sm:$0xff]
    %v76 = vld [vmem:[%s2 + $0xc0] sm:$0xff]
    %v77 = vld [vmem:[%s2 + $0xc8] sm:$0xff]
    %v78 = vld [vmem:[%s2 + $0xd0] sm:$0xff]
    %v79 = vld [vmem:[%s2 + $0xd8] sm:$0xff]
    %v80 = vld [vmem:[%s2 + $0xe0] sm:$0xff]
    %v81 = vld [vmem:[%s2 + $0xe8] sm:$0xff]
    %v82 = vld [vmem:[%s2 + $0xf0] sm:$0xff]
    %v83 = vld [vmem:[%s2 + $0xf8] sm:$0xff]
    %v84 = vld [vmem:[#allocation5] sm:$0xff]
    %v85 = vld [vmem:[%s3] sm:$0xff]
    %v86 = vld [vmem:[%s3 + $0x8] sm:$0xff]
    %v87 = vld [vmem:[%s3 + $0x10] sm:$0x3]
    %v88 = vld [vmem:[%s3 + $0x18] sm:$0x3]
    %vm89 = vcmask 80896
    %v91 = vsel %vm89, %v84, 0
    %vm93 = vcmask 1041408
    %v95 = vsel %vm93, %v87, 0
    %v98 = vsel %vm93, %v88, 0
    %100 = vmatprep.subr.mxu0 %v86
    %101 = vmatpush1.msra.mxu0 %v85
    %102 = vmatprep.subr.mxu0 %v98
    %103 = vmatpush1.msra.mxu0 %v95
    %104 = vmatprep.subr.mxu0 0.0
    %105 = vmatpush1.msra.mxu0 0.0
    %106 = vmatprep.subr.mxu0 0.0
    %107 = vmatpush1.msra.mxu0 0.0
    %108 = vmatprep.subr.mxu0 0.0
    %109 = vmatpush1.msra.mxu0 0.0
    %110 = vmatprep.subr.mxu0 0.0
    %111 = vmatpush1.msra.mxu0 0.0
    %112 = vmatprep.subr.mxu0 0.0
    %113 = vmatpush1.msra.mxu0 0.0
    %114 = vmatprep.subr.mxu0 0.0
    %115 = vmatpush1.msra.mxu0 0.0
    %116 = vmatprep.subr.mxu0 0.0
    %117 = vmatpush1.msra.mxu0 0.0
    %118 = vmatprep.subr.mxu0 0.0
    %119 = vmatpush1.msra.mxu0 0.0
    %120 = vmatprep.subr.mxu0 0.0
    %121 = vmatpush1.msra.mxu0 0.0
    %122 = vmatprep.subr.mxu0 0.0
    %123 = vmatpush1.msra.mxu0 0.0
    %124 = vmatprep.subr.mxu0 0.0
    %125 = vmatpush1.msra.mxu0 0.0
    %126 = vmatprep.subr.mxu0 0.0
    %127 = vmatpush1.msra.mxu0 0.0
    %128 = vmatprep.subr.mxu0 0.0
    %129 = vmatpush1.msra.mxu0 0.0
    %130 = vmatprep.subr.mxu0 0.0
    %131 = vmatpush1.msra.mxu0 0.0
    %132 = vmatprep.subr.mxu0 0.0
    %133 = vmatpush1.msra.mxu0 0.0
    %134 = vmatprep.subr.mxu0 0.0
    %135 = vmatpush1.msra.mxu0 0.0
    %136 = vmatprep.subr.mxu0 0.0
    %137 = vmatpush1.msra.mxu0 0.0
    %138 = vmatprep.subr.mxu0 0.0
    %139 = vmatpush1.msra.mxu0 0.0
    %140 = vmatprep.subr.mxu0 0.0
    %141 = vmatpush1.msra.mxu0 0.0
    %142 = vmatprep.subr.mxu0 0.0
    %143 = vmatpush1.msra.mxu0 0.0
    %144 = vmatprep.subr.mxu0 0.0
    %145 = vmatpush1.msra.mxu0 0.0
    %146 = vmatprep.subr.mxu0 0.0
    %147 = vmatpush1.msra.mxu0 0.0
    %148 = vmatprep.subr.mxu0 0.0
    %149 = vmatpush1.msra.mxu0 0.0
    %150 = vmatprep.subr.mxu0 0.0
    %151 = vmatpush1.msra.mxu0 0.0
    %152 = vmatprep.subr.mxu0 0.0
    %153 = vmatpush1.msra.mxu0 0.0
    %154 = vmatprep.subr.mxu0 0.0
    %155 = vmatpush1.msra.mxu0 0.0
    %156 = vmatprep.subr.mxu0 0.0
    %157 = vmatpush1.msra.mxu0 0.0
    %158 = vmatprep.subr.mxu0 0.0
    %159 = vmatpush1.msra.mxu0 0.0
    %160 = vmatprep.subr.mxu0 0.0
    %161 = vmatpush1.msra.mxu0 0.0
    %162 = vmatprep.subr.mxu0 0.0
    %163 = vmatpush1.msra.mxu0 0.0
    %164 = vmatprep.mubr.f32.mxu0 0.0
    %165 = vmatmul.mubr.f32.gmra.mrb[0].mxu0 %v91
    %v166 = vpop.f32.mrb[0].mxu0
    %v167 = vadd.f32 0.0, %v166
    %v168 = vpop.f32.mrb[0].mxu0
    %v169 = vadd.f32 0.0, %v168
    %170 = vdwg.mxu0
    %171 = vmatprep.subr.mxu0 %v53
    %172 = vmatpush1.msra.mxu0 %v52
    %173 = vmatprep.subr.mxu0 %v55
    %174 = vmatpush1.msra.mxu0 %v54
    %175 = vmatprep.subr.mxu0 %v57
    %176 = vmatpush1.msra.mxu0 %v56
    %177 = vmatprep.subr.mxu0 %v59
    %178 = vmatpush1.msra.mxu0 %v58
    %179 = vmatprep.subr.mxu0 %v61
    %180 = vmatpush1.msra.mxu0 %v60
    %181 = vmatprep.subr.mxu0 %v63
    %182 = vmatpush1.msra.mxu0 %v62
    %183 = vmatprep.subr.mxu0 %v65
    %184 = vmatpush1.msra.mxu0 %v64
    %185 = vmatprep.subr.mxu0 %v67
    %186 = vmatpush1.msra.mxu0 %v66
    %187 = vmatprep.subr.mxu0 %v69
    %188 = vmatpush1.msra.mxu0 %v68
    %189 = vmatprep.subr.mxu0 %v71
    %190 = vmatpush1.msra.mxu0 %v70
    %191 = vmatprep.subr.mxu0 %v73
    %192 = vmatpush1.msra.mxu0 %v72
    %193 = vmatprep.subr.mxu0 %v75
    %194 = vmatpush1.msra.mxu0 %v74
    %195 = vmatprep.subr.mxu0 %v77
    %196 = vmatpush1.msra.mxu0 %v76
    %197 = vmatprep.subr.mxu0 %v79
    %198 = vmatpush1.msra.mxu0 %v78
    %199 = vmatprep.subr.mxu0 %v81
    %200 = vmatpush1.msra.mxu0 %v80
    %201 = vmatprep.subr.mxu0 %v83
    %202 = vmatpush1.msra.mxu0 %v82
    %203 = vmatprep.subr.mxu0 0.0
    %204 = vmatpush1.msra.mxu0 0.0
    %205 = vmatprep.subr.mxu0 0.0
    %206 = vmatpush1.msra.mxu0 0.0
    %207 = vmatprep.subr.mxu0 0.0
    %208 = vmatpush1.msra.mxu0 0.0
    %209 = vmatprep.subr.mxu0 0.0
    %210 = vmatpush1.msra.mxu0 0.0
    %211 = vmatprep.subr.mxu0 0.0
    %212 = vmatpush1.msra.mxu0 0.0
    %213 = vmatprep.subr.mxu0 0.0
    %214 = vmatpush1.msra.mxu0 0.0
    %215 = vmatprep.subr.mxu0 0.0
    %216 = vmatpush1.msra.mxu0 0.0
    %217 = vmatprep.subr.mxu0 0.0
    %218 = vmatpush1.msra.mxu0 0.0
    %219 = vmatprep.subr.mxu0 0.0
    %220 = vmatpush1.msra.mxu0 0.0
    %221 = vmatprep.subr.mxu0 0.0
    %222 = vmatpush1.msra.mxu0 0.0
    %223 = vmatprep.subr.mxu0 0.0
    %224 = vmatpush1.msra.mxu0 0.0
    %225 = vmatprep.subr.mxu0 0.0
    %226 = vmatpush1.msra.mxu0 0.0
    %227 = vmatprep.subr.mxu0 0.0
    %228 = vmatpush1.msra.mxu0 0.0
    %229 = vmatprep.subr.mxu0 0.0
    %230 = vmatpush1.msra.mxu0 0.0
    %231 = vmatprep.subr.mxu0 0.0
    %232 = vmatpush1.msra.mxu0 0.0
    %233 = vmatprep.subr.mxu0 0.0
    %234 = vmatpush1.msra.mxu0 0.0
    %235 = vmatprep.mubr.f32.mxu0 0.0
    %236 = vmatmul.mubr.f32.gmra.mrb[0].mxu0 %v51
    %v237 = vpop.f32.mrb[0].mxu0
    %v238 = vadd.f32 %v167, %v237
    %v239 = vpop.f32.mrb[0].mxu0
    %v240 = vadd.f32 %v169, %v239
    %241 = vdwg.mxu0
    %v242 = vld [vmem:[%s4] sm:$0x3]
    %v244 = vlaneseq
    %v245 = vshrl.u32 %v244, 7
    %v246 = vsub.s32 0, %v245
    %v247 = vrot.slane %v242, %v246
    %v248 = vlaneseq
    %v249 = vshrl.u32 %v248, 7
    %v250 = vsub.s32 1, %v249
    %v251 = vrot.slane %v242, %v250
    %v254 = vadd.f32 %v238, %v247
    %v255 = vadd.f32 %v240, %v251
    %v256 = vmax.f32 %v254, 0.0
    %v257 = vmax.f32 %v255, 0.0
    %v258 = vld [vmem:[%s5] sm:$0xff]
    %v259 = vld [vmem:[%s5 + $0x8] sm:$0xff]
    %v260 = vld [vmem:[%s5 + $0x10] sm:$0xff]
    %v261 = vld [vmem:[%s5 + $0x18] sm:$0xff]
    %v262 = vld [vmem:[%s5 + $0x20] sm:$0xff]
    %v263 = vld [vmem:[%s5 + $0x28] sm:$0xff]
    %v264 = vld [vmem:[%s5 + $0x30] sm:$0xff]
    %v265 = vld [vmem:[%s5 + $0x38] sm:$0xff]
    %v266 = vld [vmem:[%s5 + $0x40] sm:$0xff]
    %v267 = vld [vmem:[%s5 + $0x48] sm:$0xff]
    %v268 = vld [vmem:[%s5 + $0x50] sm:$0xff]
    %v269 = vld [vmem:[%s5 + $0x58] sm:$0xff]
    %v270 = vld [vmem:[%s5 + $0x60] sm:$0xff]
    %v271 = vld [vmem:[%s5 + $0x68] sm:$0xff]
    %v272 = vld [vmem:[%s5 + $0x70] sm:$0xff]
    %v273 = vld [vmem:[%s5 + $0x78] sm:$0xff]
    %v274 = vld [vmem:[%s5 + $0x80] sm:$0xff]
    %v275 = vld [vmem:[%s5 + $0x88] sm:$0xff]
    %v276 = vld [vmem:[%s5 + $0x90] sm:$0xff]
    %v277 = vld [vmem:[%s5 + $0x98] sm:$0xff]
    %v278 = vld [vmem:[%s5 + $0xa0] sm:$0xff]
    %v279 = vld [vmem:[%s5 + $0xa8] sm:$0xff]
    %v280 = vld [vmem:[%s5 + $0xb0] sm:$0xff]
    %v281 = vld [vmem:[%s5 + $0xb8] sm:$0xff]
    %v282 = vld [vmem:[%s5 + $0xc0] sm:$0xff]
    %v283 = vld [vmem:[%s5 + $0xc8] sm:$0xff]
    %v284 = vld [vmem:[%s5 + $0xd0] sm:$0xff]
    %v285 = vld [vmem:[%s5 + $0xd8] sm:$0xff]
    %v286 = vld [vmem:[%s5 + $0xe0] sm:$0xff]
    %v287 = vld [vmem:[%s5 + $0xe8] sm:$0xff]
    %v288 = vld [vmem:[%s5 + $0xf0] sm:$0xff]
    %v289 = vld [vmem:[%s5 + $0xf8] sm:$0xff]
    %v290 = vld [vmem:[%s6] sm:$0x1]
    %v292 = vlaneseq
    %v293 = vshrl.u32 %v292, 7
    %v294 = vsub.s32 0, %v293
    %v295 = vrot.slane %v290, %v294
    %297 = vmatprep.subr.mxu0 0.0
    %298 = vmatpush1.msra.mxu0 %v258
    %299 = vmatprep.subr.mxu0 0.0
    %300 = vmatpush1.msra.mxu0 %v259
    %301 = vmatprep.subr.mxu0 0.0
    %302 = vmatpush1.msra.mxu0 %v260
    %303 = vmatprep.subr.mxu0 0.0
    %304 = vmatpush1.msra.mxu0 %v261
    %305 = vmatprep.subr.mxu0 0.0
    %306 = vmatpush1.msra.mxu0 %v262
    %307 = vmatprep.subr.mxu0 0.0
    %308 = vmatpush1.msra.mxu0 %v263
    %309 = vmatprep.subr.mxu0 0.0
    %310 = vmatpush1.msra.mxu0 %v264
    %311 = vmatprep.subr.mxu0 0.0
    %312 = vmatpush1.msra.mxu0 %v265
    %313 = vmatprep.subr.mxu0 0.0
    %314 = vmatpush1.msra.mxu0 %v266
    %315 = vmatprep.subr.mxu0 0.0
    %316 = vmatpush1.msra.mxu0 %v267
    %317 = vmatprep.subr.mxu0 0.0
    %318 = vmatpush1.msra.mxu0 %v268
    %319 = vmatprep.subr.mxu0 0.0
    %320 = vmatpush1.msra.mxu0 %v269
    %321 = vmatprep.subr.mxu0 0.0
    %322 = vmatpush1.msra.mxu0 %v270
    %323 = vmatprep.subr.mxu0 0.0
    %324 = vmatpush1.msra.mxu0 %v271
    %325 = vmatprep.subr.mxu0 0.0
    %326 = vmatpush1.msra.mxu0 %v272
    %327 = vmatprep.subr.mxu0 0.0
    %328 = vmatpush1.msra.mxu0 %v273
    %329 = vmatprep.subr.mxu0 0.0
    %330 = vmatpush1.msra.mxu0 %v274
    %331 = vmatprep.subr.mxu0 0.0
    %332 = vmatpush1.msra.mxu0 %v275
    %333 = vmatprep.subr.mxu0 0.0
    %334 = vmatpush1.msra.mxu0 %v276
    %335 = vmatprep.subr.mxu0 0.0
    %336 = vmatpush1.msra.mxu0 %v277
    %337 = vmatprep.subr.mxu0 0.0
    %338 = vmatpush1.msra.mxu0 %v278
    %339 = vmatprep.subr.mxu0 0.0
    %340 = vmatpush1.msra.mxu0 %v279
    %341 = vmatprep.subr.mxu0 0.0
    %342 = vmatpush1.msra.mxu0 %v280
    %343 = vmatprep.subr.mxu0 0.0
    %344 = vmatpush1.msra.mxu0 %v281
    %345 = vmatprep.subr.mxu0 0.0
    %346 = vmatpush1.msra.mxu0 %v282
    %347 = vmatprep.subr.mxu0 0.0
    %348 = vmatpush1.msra.mxu0 %v283
    %349 = vmatprep.subr.mxu0 0.0
    %350 = vmatpush1.msra.mxu0 %v284
    %351 = vmatprep.subr.mxu0 0.0
    %352 = vmatpush1.msra.mxu0 %v285
    %353 = vmatprep.subr.mxu0 0.0
    %354 = vmatpush1.msra.mxu0 %v286
    %355 = vmatprep.subr.mxu0 0.0
    %356 = vmatpush1.msra.mxu0 %v287
    %357 = vmatprep.subr.mxu0 0.0
    %358 = vmatpush1.msra.mxu0 %v288
    %359 = vmatprep.subr.mxu0 0.0
    %360 = vmatpush1.msra.mxu0 %v289
    %361 = vmatprep.mubr.f32.mxu0 %v257
    %362 = vmatmul.mubr.f32.gmra.mrb[0].mxu0 %v256
    %v363 = vpop.f32.mrb[0].mxu0
    %v364 = vadd.f32 %v295, %v363
    %v365 = vpop.f32.mrb[0].mxu0
    %366 = vdwg.mxu0
    %367 = vst.msk [vmem:[#allocation7] sm:$0xff] %vm89, %v364
    // Predicated region
    $region38: #{tpu_custom_call.1} parent=1 // pred_check
      _
    $region39: #{tpu_custom_call.1} parent=1 // pred_check_branch
      %369 = sbr.rel (0) target = $region41
    $region40: #{tpu_custom_call.1} parent=1 // pred_region
      %s371 = ssub.s32 128, 128
      %372 = vsyncadd [#allocation4], %s371
      %s374 = sshll.u32 [#allocation7], 4
      %s375 = int_to_ptr.vmem [resolvable:$true] %s374
      %377 = dma.vmem_to_hbm [thread:$0]  %s375, 128, %s7, [#allocation4]
    $region41: #{tpu_custom_call.1} parent=1 // pred_fallthru
      _
    // Predicated region
    $region42: #{tpu_custom_call.1} parent=1 // pred_check
      _
    $region43: #{tpu_custom_call.1} parent=1 // pred_check_branch
      %379 = sbr.rel (0) target = $region45
    $region44: #{tpu_custom_call.1} parent=1 // pred_region
      %380 = dma.done [#allocation4], 128
    $region45: #{tpu_custom_call.1} parent=1 // pred_fallthru
      _
    %381 = vsyncpa [#allocation3], 1
    %382 = vsyncpa [#allocation6], 1
    %383 = vsyncpa [#allocation4], 1

</llo_original>
